<compile_context>
chip_gen: v7x
topology: tpu7x:2x2x1
jax: 0.10.0
libtpu: 0.0.40
codegen_flags: <defaults>
</compile_context>

<pallas_src>
import math

import jax
import jax.numpy as jnp
from jax import lax
from jax.experimental import pallas as pl
from jax.experimental.pallas import tpu as pltpu


# --------------------------------------------------------------------------
# Kernel 1: tiled dense projection  y = (x @ w) * out_scale
#   x: (T, Din) f32, w: (Din, Dm) f32 -> y: (T, Dm) bf16
#   bf16 MXU operands, f32 accumulate in VMEM scratch, scale in the epilogue.
# --------------------------------------------------------------------------
def _make_linear_kernel(out_scale):
    def kernel(x_ref, w_ref, o_ref, acc_ref):
        @pl.when(pl.program_id(2) == 0)
        def _init():
            acc_ref[...] = jnp.zeros_like(acc_ref)

        acc_ref[...] += jnp.dot(
            x_ref[...].astype(jnp.bfloat16),
            w_ref[...].astype(jnp.bfloat16),
            preferred_element_type=jnp.float32,
        )

        @pl.when(pl.program_id(2) == pl.num_programs(2) - 1)
        def _store():
            acc = acc_ref[...]
            if out_scale is not None:
                acc = acc * jnp.float32(out_scale)
            o_ref[...] = acc.astype(o_ref.dtype)

    return kernel


def _pick_k_tile(din, max_tk):
    """K tile must divide Din exactly (no garbage in the contraction)."""
    if din <= max_tk:
        return din
    for cand in range(max_tk, 0, -128):        # 128-aligned candidates only
        if cand % 128 == 0 and din % cand == 0:
            return cand
    # TODO(synk): pad-and-mask path for large Din with no 128-aligned divisor;
    #             falling back to a single (TM, Din) K block for now.
    return din


def linear_proj(x, w, *, out_scale=None, out_dtype=jnp.bfloat16,
                tm=512, tn=512, tk=512):
    """x: (B, L, Din), w: (Din, Dm) -> (B, L, Dm) in out_dtype (bf16)."""
    B, L, Din = x.shape
    Dm = w.shape[1]
    T = B * L
    x2 = x.reshape(T, Din)

    # Either the full dim (always legal) or an (8,128)-aligned tile.
    TM = T if T <= tm else tm                  # tm is a multiple of 8
    TN = Dm if Dm <= tn else tn                # tn is a multiple of 128
    TK = _pick_k_tile(Din, tk)

    grid = (pl.cdiv(T, TM), pl.cdiv(Dm, TN), Din // TK)

    y = pl.pallas_call(
        _make_linear_kernel(out_scale),
        out_shape=jax.ShapeDtypeStruct((T, Dm), out_dtype),
        grid=grid,
        in_specs=[
            pl.BlockSpec((TM, TK), lambda i, j, k: (i, k)),
            pl.BlockSpec((TK, TN), lambda i, j, k: (k, j)),
        ],
        out_specs=pl.BlockSpec((TM, TN), lambda i, j, k: (i, j)),
        scratch_shapes=[pltpu.VMEM((TM, TN), jnp.float32)],
        compiler_params=pltpu.CompilerParams(
            dimension_semantics=("parallel", "parallel", "arbitrary"),
            vmem_limit_bytes=48 * 1024 * 1024,
        ),
    )(x2, w)
    return y.reshape(B, L, Dm)


# --------------------------------------------------------------------------
# Kernel 2: multi-head scaled dot product attention.
# q/k/v are bf16 (B, S/L, d_model) with heads packed along d_model; one grid
# step handles G batch elements x all heads.  Per-head outputs are staged in
# a full-width (S, d_model) f32 VMEM buffer and flushed with a single
# lane-dense store per batch element.
# --------------------------------------------------------------------------
def _make_attn_kernel(nhead, hd, masked):
    def kernel(*refs):
        if masked:
            m_ref, q_ref, k_ref, v_ref, o_ref, stage_ref = refs
        else:
            q_ref, k_ref, v_ref, o_ref, stage_ref = refs
            m_ref = None
        G = q_ref.shape[0]
        for g in range(G):                      # G is small (<= B//2)
            pad = None if m_ref is None else (m_ref[g] != 0)     # (1, L)
            for h in range(nhead):              # per-head store bounds live ranges
                lo = h * hd
                q = q_ref[g, :, lo:lo + hd]     # bf16 (S, hd); scale folded into w_q
                k = k_ref[g, :, lo:lo + hd]     # bf16 (L, hd)
                v = v_ref[g, :, lo:lo + hd]     # bf16 (L, hd)
                # (S, hd) x (L, hd), contracting last dims: no k.T relayout;
                # bf16 operands, f32 accumulate on the MXU.
                s = lax.dot_general(
                    q, k, (((1,), (1,)), ((), ())),
                    preferred_element_type=jnp.float32)
                if pad is not None:
                    # torch masked_fill(key_padding_mask, -1e9) semantics.
                    s = jnp.where(pad, jnp.float32(-1000000000.0), s)
                # Manual f32 softmax; divide goes to the EUP via approx recip.
                m_row = jnp.max(s, axis=-1, keepdims=True)
                p = jnp.exp(s - m_row)
                denom = jnp.sum(p, axis=-1, keepdims=True)
                out = jnp.dot(p.astype(jnp.bfloat16), v,
                              preferred_element_type=jnp.float32)
                stage_ref[:, lo:lo + hd] = out * pl.reciprocal(denom, approx=True)
            # One lane-dense HBM store per batch element (d_model lanes).
            o_ref[g] = stage_ref[...].astype(o_ref.dtype)
    return kernel


def _batch_group(B, S, L, D, target_rows=256, vmem_budget=32 * 1024 * 1024):
    """Batch elements per grid step: amortize per-step overhead, keep >=2
    grid steps (v7x megacore) and keep the block footprint under budget."""
    g = max(1, min(B, target_rows // max(S, 1)))
    if B >= 2:
        g = min(g, B // 2)          # at least 2 parallel grid steps
    while B % g:
        g -= 1

    def footprint(gg):
        qkv = 2 * (gg * S * D * 2) + 2 * 2 * (gg * L * D * 2)  # dbl-buffered bf16
        out = 2 * (gg * S * D * 4)                              # dbl-buffered f32
        stage = S * D * 4
        return qkv + out + stage

    while g > 1 and footprint(g) > vmem_budget:
        g -= 1
        while B % g:
            g -= 1
    # TODO(synk): if footprint(1) still exceeds budget (very long L on v7x),
    #             an online-softmax L-tiled path is required.
    return g


def mha_attention(q, k, v, nhead, key_padding_mask=None):
    """q: (B, S, D) bf16, k/v: (B, L, D) bf16, mask: (B, L) or None -> (B, S, D) f32."""
    B, S, D = q.shape
    L = k.shape[1]
    hd = D // nhead
    G = _batch_group(B, S, L, D)
    grid = (B // G,)

    q_spec = pl.BlockSpec((G, S, D), lambda b: (b, 0, 0))
    kv_spec = pl.BlockSpec((G, L, D), lambda b: (b, 0, 0))
    o_spec = pl.BlockSpec((G, S, D), lambda b: (b, 0, 0))
    out_shape = jax.ShapeDtypeStruct((B, S, D), jnp.float32)
    scratch = [pltpu.VMEM((S, D), jnp.float32)]
    cparams = pltpu.CompilerParams(
        dimension_semantics=("parallel",),
        vmem_limit_bytes=48 * 1024 * 1024,
    )

    if key_padding_mask is None:
        kernel = _make_attn_kernel(nhead, hd, masked=False)
        return pl.pallas_call(
            kernel, out_shape=out_shape, grid=grid,
            in_specs=[q_spec, kv_spec, kv_spec],
            out_specs=o_spec, scratch_shapes=scratch,
            compiler_params=cparams,
        )(q, k, v)

    mask = key_padding_mask.astype(jnp.int32).reshape(B, 1, L)
    m_spec = pl.BlockSpec((G, 1, L), lambda b: (b, 0, 0))
    kernel = _make_attn_kernel(nhead, hd, masked=True)
    return pl.pallas_call(
        kernel, out_shape=out_shape, grid=grid,
        in_specs=[m_spec, q_spec, kv_spec, kv_spec],
        out_specs=o_spec, scratch_shapes=scratch,
        compiler_params=cparams,
    )(mask, q, k, v)


# --------------------------------------------------------------------------
# MultiHeadAttention forward (bias=False, use_spectral_norm=False,
# rel_enhancement=False — the module defaults)
# --------------------------------------------------------------------------
def multihead_attention(params, q, k, v, nhead, key_padding_mask=None):
    d_model = params["w_q"].shape[1]
    if d_model % nhead != 0:
        raise ValueError("d_model must be divisible by nhead")
    hd = d_model // nhead
    scale = 1.0 / math.sqrt(hd)
    # 1/sqrt(dk) folded into the q-projection epilogue (free); bf16 handoff.
    qp = linear_proj(q, params["w_q"], out_scale=scale)
    kp = linear_proj(k, params["w_k"])
    vp = linear_proj(v, params["w_v"])
    # Head split/merge is fused into the attention kernel by slicing the
    # d_model lanes per head (equivalent to _reshape_to/from_batches).
    return mha_attention(qp, kp, vp, nhead, key_padding_mask)


def init_params(key, query_features, key_features, value_features, d_model):
    # nn.init.normal_(weight, 0.0, 0.02); torch weight is (d_model, in_feat),
    # stored here pre-transposed as (in_feat, d_model) so y = x @ W.
    k1, k2, k3, k4 = jax.random.split(key, 4)
    std = 0.02
    return {
        "w_q": std * jax.random.normal(k1, (query_features, d_model), jnp.float32),
        "w_k": std * jax.random.normal(k2, (key_features, d_model), jnp.float32),
        "w_v": std * jax.random.normal(k3, (value_features, d_model), jnp.float32),
        "w_r": std * jax.random.normal(k4, (value_features, d_model), jnp.float32),
    }


# --------------------------------------------------------------------------
# Pure-JAX f32 reference (mirrors the torch module) for validation only.
# --------------------------------------------------------------------------
def _reshape_to_batches(x, nhead):
    B, L, D = x.shape
    sub = D // nhead
    return jnp.transpose(x.reshape(B, L, nhead, sub), (0, 2, 1, 3)).reshape(
        B * nhead, L, sub)


def _reshape_from_batches(x, nhead):
    BN, L, sub = x.shape
    B = BN // nhead
    return jnp.transpose(x.reshape(B, nhead, L, sub), (0, 2, 1, 3)).reshape(
        B, L, sub * nhead)


def ref_forward(params, q, k, v, nhead, key_padding_mask=None):
    qp = q @ params["w_q"]
    kp = k @ params["w_k"]
    vp = v @ params["w_v"]
    qb = _reshape_to_batches(qp, nhead)
    kb = _reshape_to_batches(kp, nhead)
    vb = _reshape_to_batches(vp, nhead)
    dk = qb.shape[-1]
    scores = jnp.einsum("bsd,bld->bsl", qb, kb) / math.sqrt(dk)
    if key_padding_mask is not None:
        m = jnp.tile(key_padding_mask, (nhead, 1))[:, None, :]
        scores = jnp.where(m, jnp.float32(-1000000000.0), scores)
    attn = jax.nn.softmax(scores, axis=-1)
    out = jnp.einsum("bsl,bld->bsd", attn, vb)
    return _reshape_from_batches(out, nhead)


if __name__ == "__main__":
    B, S, L = 2, 8, 8
    query_features, key_features, value_features = 16, 24, 24
    d_model, nhead = 32, 4

    root = jax.random.PRNGKey(0)
    kparam, kq, kk, kv = jax.random.split(root, 4)

    params = init_params(kparam, query_features, key_features, value_features,
                         d_model)
    q = jax.random.normal(kq, (B, S, query_features), jnp.float32)
    k = jax.random.normal(kk, (B, L, key_features), jnp.float32)
    v = jax.random.normal(kv, (B, L, value_features), jnp.float32)

    # Unmasked path.
    y = jax.block_until_ready(multihead_attention(params, q, k, v, nhead))

    # Masked path (pad the last two keys of every batch element).
    mask = jnp.zeros((B, L), jnp.bool_).at[:, L - 2:].set(True)
    y_m = jax.block_until_ready(
        multihead_attention(params, q, k, v, nhead, key_padding_mask=mask))

    y_ref = ref_forward(params, q, k, v, nhead)
    y_m_ref = ref_forward(params, q, k, v, nhead, key_padding_mask=mask)

    assert y.shape == (B, S, d_model)
    # Tolerance reflects bf16 MXU operands, bf16 projection handoff and the
    # EUP approximate reciprocal in the softmax normalization (vs f32 ref).
    assert jnp.allclose(y, y_ref, atol=2e-2, rtol=2e-2), \
        float(jnp.max(jnp.abs(y - y_ref)))
    assert jnp.allclose(y_m, y_m_ref, atol=2e-2, rtol=2e-2), \
        float(jnp.max(jnp.abs(y_m - y_m_ref)))

    print("KERNEL_OK")
</pallas_src>

<mosaic_0001>
module attributes {stable_mosaic.version = 11 : i64} {
  func.func @kernel(%arg0: i32, %arg1: i32, %arg2: i32, %arg3: memref<16x16xf32, #tpu.memory_space<vmem>>, %arg4: memref<16x32xf32, #tpu.memory_space<vmem>>, %arg5: memref<16x32xbf16, #tpu.memory_space<vmem>>, %arg6: memref<16x32xf32, #tpu.memory_space<vmem>>) attributes {dimension_semantics = [#tpu.dimension_semantics<parallel>, #tpu.dimension_semantics<parallel>, #tpu.dimension_semantics<arbitrary>], iteration_bounds = array<i64: 1, 1, 1>, scalar_prefetch = 0 : i64, scratch_operands = 1 : i64, tpu.core_type = #tpu.core_type<tc>, window_params = [{transform_indices = @transform_0, window_bounds = array<i64: 16, 16>}, {transform_indices = @transform_1, window_bounds = array<i64: 16, 32>}, {transform_indices = @transform_2, window_bounds = array<i64: 16, 32>}]} {
    %c0_i32 = arith.constant 0 : i32
    %0 = arith.cmpi eq, %arg2, %c0_i32 : i32
    %1 = arith.extui %0 : i1 to i32
    %c0_i32_0 = arith.constant 0 : i32
    %2 = arith.cmpi ne, %1, %c0_i32_0 : i32
    scf.if %2 {
      %cst_10 = arith.constant 0.000000e+00 : f32
      %14 = vector.broadcast %cst_10 : f32 to vector<16x32xf32>
      %c0_11 = arith.constant 0 : index
      %c0_12 = arith.constant 0 : index
      %15 = vector.load %arg6[%c0_11, %c0_12] : memref<16x32xf32, #tpu.memory_space<vmem>>, vector<16x32xf32>
      tpu.vector_store %arg6[%c0_11, %c0_12], %14 {strides = array<i32>} : memref<16x32xf32, #tpu.memory_space<vmem>>, vector<16x32xf32>,
    } else {
    }
    %c0 = arith.constant 0 : index
    %c0_1 = arith.constant 0 : index
    %3 = vector.load %arg6[%c0, %c0_1] : memref<16x32xf32, #tpu.memory_space<vmem>>, vector<16x32xf32>
    %c0_2 = arith.constant 0 : index
    %c0_3 = arith.constant 0 : index
    %4 = vector.load %arg3[%c0_2, %c0_3] : memref<16x16xf32, #tpu.memory_space<vmem>>, vector<16x16xf32>
    %5 = arith.truncf %4 : vector<16x16xf32> to vector<16x16xbf16>
    %c0_4 = arith.constant 0 : index
    %c0_5 = arith.constant 0 : index
    %6 = vector.load %arg4[%c0_4, %c0_5] : memref<16x32xf32, #tpu.memory_space<vmem>>, vector<16x32xf32>
    %7 = arith.truncf %6 : vector<16x32xf32> to vector<16x32xbf16>
    %cst = arith.constant dense<0.000000e+00> : vector<16x32xf32>
    %8 = tpu.matmul %5, %7, %cst {dimension_numbers = #tpu.dot_dimension_numbers<[1], [0], [0], [1], [0, 0, 1, 1], [], []>} : vector<16x16xbf16>, vector<16x32xbf16>, vector<16x32xf32> -> vector<16x32xf32>
    %9 = arith.addf %3, %8 : vector<16x32xf32>
    %c0_6 = arith.constant 0 : index
    %c0_7 = arith.constant 0 : index
    %10 = vector.load %arg6[%c0_6, %c0_7] : memref<16x32xf32, #tpu.memory_space<vmem>>, vector<16x32xf32>
    tpu.vector_store %arg6[%c0_6, %c0_7], %9 {strides = array<i32>} : memref<16x32xf32, #tpu.memory_space<vmem>>, vector<16x32xf32>,
    %c0_i32_8 = arith.constant 0 : i32
    %11 = arith.cmpi eq, %arg2, %c0_i32_8 : i32
    %12 = arith.extui %11 : i1 to i32
    %c0_i32_9 = arith.constant 0 : i32
    %13 = arith.cmpi ne, %12, %c0_i32_9 : i32
    scf.if %13 {
      %c0_10 = arith.constant 0 : index
      %c0_11 = arith.constant 0 : index
      %14 = vector.load %arg6[%c0_10, %c0_11] : memref<16x32xf32, #tpu.memory_space<vmem>>, vector<16x32xf32>
      %cst_12 = arith.constant 0.353553385 : f32
      %15 = vector.broadcast %cst_12 : f32 to vector<16x32xf32>
      %16 = arith.mulf %14, %15 : vector<16x32xf32>
      %17 = arith.truncf %16 : vector<16x32xf32> to vector<16x32xbf16>
      %c0_13 = arith.constant 0 : index
      %c0_14 = arith.constant 0 : index
      %18 = vector.load %arg5[%c0_13, %c0_14] : memref<16x32xbf16, #tpu.memory_space<vmem>>, vector<16x32xbf16>
      tpu.vector_store %arg5[%c0_13, %c0_14], %17 {strides = array<i32>} : memref<16x32xbf16, #tpu.memory_space<vmem>>, vector<16x32xbf16>,
    } else {
    }
    return
  }
  func.func @transform_0(%arg0: i32, %arg1: i32, %arg2: i32) -> (i32, i32) {
    %c0_i32 = arith.constant 0 : i32
    return %arg0, %arg2 : i32, i32
  }
  func.func @transform_1(%arg0: i32, %arg1: i32, %arg2: i32) -> (i32, i32) {
    %c0_i32 = arith.constant 0 : i32
    return %arg2, %arg1 : i32, i32
  }
  func.func @transform_2(%arg0: i32, %arg1: i32, %arg2: i32) -> (i32, i32) {
    %c0_i32 = arith.constant 0 : i32
    return %arg0, %arg1 : i32, i32
  }
}

</mosaic_0001>

<llo_original>
// kernel: tpu_custom_call.1
$region0: #{tpu_custom_call.1}
  #allocation0 [shape = 'u32[]', space=smem, size = 0x4, offset = 0x4, fixed_abs, tag = 'smem constant byte address 0x4 - core index']
  #allocation1 [shape = 'u32[144,128]{1,0:T(1,128)}', space=vmem, size = 0x12000, scoped, tag = 'internal scratch']
  #allocation2 [shape = 'f32[16,32]{1,0:T(8,128)}', space=vmem, size = 0x2000, scoped, tag = 'scratch operand']
  %s0 = inlined_call_operand.hbm [shape: f32[16,16], index: 0, kind: input, shape index: {}]
  %s1 = inlined_call_operand.hbm [shape: f32[16,32], index: 1, kind: input, shape index: {}]
  %s2 = inlined_call_operand.hbm [shape: bf16[16,32], index: 2, kind: output, shape index: {}]
  %s3 = sld [smem:[#allocation0]]
  $region34: #{tpu_custom_call.1} parent=0
    _
  %s5 = ssub.s32 1, %s3
  %s6 = scalar_select 0, %s5, %s3
  $region1: #{tpu_custom_call.1} parent=0
    #allocation3 [shape = 'u8[8192]{0}', space=vmem, size = 0x2000, scoped, tag = 'input window, operand 0, single buffered']
    #allocation4 [shape = 's32[1]{0}', space=sflag, size = 0x4, scoped, tag = 'scoped memory for tpu_custom_call.1']
    #allocation5 [shape = 's32[1]{0}', space=sflag, size = 0x4, scoped, tag = 'scoped memory for tpu_custom_call.1']
    #allocation6 [shape = 'u8[8192]{0}', space=vmem, size = 0x2000, scoped, tag = 'input window, operand 1, single buffered']
    #allocation7 [shape = 's32[1]{0}', space=sflag, size = 0x4, scoped, tag = 'scoped memory for tpu_custom_call.1']
    #allocation8 [shape = 'u8[4096]{0}', space=vmem, size = 0x1000, scoped, tag = 'output window, operand 0, single buffered']
    %7 = vsyncpa [#allocation4], 0
    %8 = vsyncpa [#allocation7], 0
    %9 = vsyncpa [#allocation5], 0
    // Predicated region
    $region2: #{tpu_custom_call.1} parent=1 // pred_check
      _
    $region3: #{tpu_custom_call.1} parent=1 // pred_check_branch
      %11 = sbr.rel (0) target = $region5
    $region4: #{tpu_custom_call.1} parent=1 // pred_region
      %s13 = ssub.s32 256, 256
      %14 = vsyncadd [#allocation4], %s13
      %s15 = sshll.u32 [#allocation3], 4
      %s16 = int_to_ptr.vmem [resolvable:$true] %s15
      %21 = dma.hbm_to_vmem [thread:$0]  %s0, 256, %s16, [#allocation4], 128, 128, 8
    $region5: #{tpu_custom_call.1} parent=1 // pred_fallthru
      _
    // Predicated region
    $region6: #{tpu_custom_call.1} parent=1 // pred_check
      _
    $region7: #{tpu_custom_call.1} parent=1 // pred_check_branch
      %23 = sbr.rel (0) target = $region9
    $region8: #{tpu_custom_call.1} parent=1 // pred_region
      %s25 = ssub.s32 256, 256
      %26 = vsyncadd [#allocation7], %s25
      %s27 = sshll.u32 [#allocation6], 4
      %s28 = int_to_ptr.vmem [resolvable:$true] %s27
      %33 = dma.hbm_to_vmem [thread:$0]  %s1, 256, %s28, [#allocation7], 128, 128, 8
    $region9: #{tpu_custom_call.1} parent=1 // pred_fallthru
      _
    // Predicated region
    $region10: #{tpu_custom_call.1} parent=1 // pred_check
      _
    $region11: #{tpu_custom_call.1} parent=1 // pred_check_branch
      %35 = sbr.rel (0) target = $region13
    $region12: #{tpu_custom_call.1} parent=1 // pred_region
      %36 = dma.done [#allocation4], 256
    $region13: #{tpu_custom_call.1} parent=1 // pred_fallthru
      _
    // Predicated region
    $region14: #{tpu_custom_call.1} parent=1 // pred_check
      _
    $region15: #{tpu_custom_call.1} parent=1 // pred_check_branch
      %38 = sbr.rel (0) target = $region17
    $region16: #{tpu_custom_call.1} parent=1 // pred_region
      %39 = dma.done [#allocation7], 256
    $region17: #{tpu_custom_call.1} parent=1 // pred_fallthru
      _
    %p41 = scmp.eq.s32.totalorder 0, 0
    // Predicated region
    $region18: #{tpu_custom_call.1} parent=1 // pred_check
      %p42 = pneg %p41
    $region19: #{tpu_custom_call.1} parent=1 // pred_check_branch
      %44 = sbr.rel (%p42) target = $region21
    $region20: #{tpu_custom_call.1} parent=1 // pred_region
      %vm45 = vcmask 261120
      %46 = vst.msk [vmem:[#allocation2] sm:$0xff] %vm45, 0.0
      %47 = vst.msk [vmem:[#allocation2 + $0x8] sm:$0xff] %vm45, 0.0
    $region21: #{tpu_custom_call.1} parent=1 // pred_fallthru
      _
    %v48 = vld [vmem:[#allocation2] sm:$0xff]
    %v49 = vld [vmem:[#allocation2 + $0x8] sm:$0xff]
    %v50 = vld [vmem:[#allocation3] sm:$0xff]
    %v51 = vld [vmem:[#allocation3 + $0x8] sm:$0xff]
    %v52 = vpack.c.bf16 %v51, %v50
    %v53 = vld [vmem:[#allocation6] sm:$0xff]
    %v54 = vld [vmem:[#allocation6 + $0x8] sm:$0xff]
    %v55 = vpack.c.bf16 %v54, %v53
    %vm56 = vcmask 130048
    %v58 = vsel %vm56, %v52, 0
    %60 = vmatprep.subr.bf16.mxu0 0
    %61 = vmatpush1.bf16.msra.mxu0 %v55
    %62 = vmatprep.subr.bf16.mxu0 0
    %63 = vmatpush1.bf16.msra.mxu0 0
    %64 = vmatprep.subr.bf16.mxu0 0
    %65 = vmatpush1.bf16.msra.mxu0 0
    %66 = vmatprep.subr.bf16.mxu0 0
    %67 = vmatpush1.bf16.msra.mxu0 0
    %68 = vmatprep.subr.bf16.mxu0 0
    %69 = vmatpush1.bf16.msra.mxu0 0
    %70 = vmatprep.subr.bf16.mxu0 0
    %71 = vmatpush1.bf16.msra.mxu0 0
    %72 = vmatprep.subr.bf16.mxu0 0
    %73 = vmatpush1.bf16.msra.mxu0 0
    %74 = vmatprep.subr.bf16.mxu0 0
    %75 = vmatpush1.bf16.msra.mxu0 0
    %76 = vmatprep.subr.bf16.mxu0 0
    %77 = vmatpush1.bf16.msra.mxu0 0
    %78 = vmatprep.subr.bf16.mxu0 0
    %79 = vmatpush1.bf16.msra.mxu0 0
    %80 = vmatprep.subr.bf16.mxu0 0
    %81 = vmatpush1.bf16.msra.mxu0 0
    %82 = vmatprep.subr.bf16.mxu0 0
    %83 = vmatpush1.bf16.msra.mxu0 0
    %84 = vmatprep.subr.bf16.mxu0 0
    %85 = vmatpush1.bf16.msra.mxu0 0
    %86 = vmatprep.subr.bf16.mxu0 0
    %87 = vmatpush1.bf16.msra.mxu0 0
    %88 = vmatprep.subr.bf16.mxu0 0
    %89 = vmatpush1.bf16.msra.mxu0 0
    %90 = vmatprep.subr.bf16.mxu0 0
    %91 = vmatpush1.bf16.msra.mxu0 0
    %92 = vmatprep.mubr.bf16.mxu0 0
    %93 = vmatmul.mubr.bf16.gmra.mrb[0].mxu0 %v58
    %v94 = vpop.f32.mrb[0].mxu0
    %v95 = vadd.f32 0.0, %v94
    %v96 = vpop.f32.mrb[0].mxu0
    %v97 = vpop.f32.mrb[0].mxu0
    %v98 = vadd.f32 0.0, %v97
    %v99 = vpop.f32.mrb[0].mxu0
    %100 = vdwg.mxu0
    %v101 = vadd.f32 %v48, %v95
    %v102 = vadd.f32 %v49, %v98
    %vm103 = vcmask 261120
    %104 = vst.msk [vmem:[#allocation2] sm:$0xff] %vm103, %v101
    %105 = vst.msk [vmem:[#allocation2 + $0x8] sm:$0xff] %vm103, %v102
    // Predicated region
    $region22: #{tpu_custom_call.1} parent=1 // pred_check
      %p106 = pneg %p41
    $region23: #{tpu_custom_call.1} parent=1 // pred_check_branch
      %108 = sbr.rel (%p106) target = $region25
    $region24: #{tpu_custom_call.1} parent=1 // pred_region
      %v109 = vld [vmem:[#allocation2] sm:$0xff]
      %v110 = vld [vmem:[#allocation2 + $0x8] sm:$0xff]
      %v111 = vmul.f32 %v109, 0.35355338
      %v112 = vmul.f32 %v110, 0.35355338
      %v113 = vpack.c.bf16 %v112, %v111
      %v115 = vunpack.c.l.b16 %v113
      %v116 = vunpack.c.h.b16 %v113
      %v117 = vpack.c.b16 %v115, %v115
      %v118 = vpack.c.b16 %v116, %v116
      %vm121 = vcmask 257024
      %122 = vst.msk [vmem:[#allocation8] sm:$0xf] %vm121, %v117
      %123 = vst.msk [vmem:[#allocation8 + $0x4] sm:$0xf] %vm121, %v118
    $region25: #{tpu_custom_call.1} parent=1 // pred_fallthru
      _
    // Predicated region
    $region26: #{tpu_custom_call.1} parent=1 // pred_check
      _
    $region27: #{tpu_custom_call.1} parent=1 // pred_check_branch
      %125 = sbr.rel (0) target = $region29
    $region28: #{tpu_custom_call.1} parent=1 // pred_region
      %s127 = ssub.s32 128, 128
      %128 = vsyncadd [#allocation5], %s127
      %s129 = sshll.u32 [#allocation8], 4
      %s130 = int_to_ptr.vmem [resolvable:$true] %s129
      %135 = dma.vmem_to_hbm [thread:$0]  %s130, 128, %s2, [#allocation5], 64, 64, 4
    $region29: #{tpu_custom_call.1} parent=1 // pred_fallthru
      _
    // Predicated region
    $region30: #{tpu_custom_call.1} parent=1 // pred_check
      _
    $region31: #{tpu_custom_call.1} parent=1 // pred_check_branch
      %137 = sbr.rel (0) target = $region33
    $region32: #{tpu_custom_call.1} parent=1 // pred_region
      %138 = dma.done [#allocation5], 128
    $region33: #{tpu_custom_call.1} parent=1 // pred_fallthru
      _
    %139 = vsyncpa [#allocation4], 1
    %140 = vsyncpa [#allocation7], 1
    %141 = vsyncpa [#allocation5], 1

</llo_original>
